<compile_context>
chip_gen: v5e
topology: v5e:2x2
jax: 0.10.0
libtpu: 0.0.40
codegen_flags: <defaults>
</compile_context>

<pallas_src>
import jax
import jax.numpy as jnp
from jax.experimental import pallas as pl
from jax.experimental.pallas import tpu as pltpu


def _round_up(n: int, m: int) -> int:
    return ((n + m - 1) // m) * m


def _pick_tile_rows(R: int, desired: int) -> int:
    """Number of 128-lane rows per grid step.

    Must be a multiple of 8 (sublanes) or equal the full extent R; keep at
    least 2 grid steps when there is enough work (v7x has 2 TensorCores).
    """
    if R <= 8:
        return R
    tr = min(desired, R)
    if R >= 16:                           # leave >=2 parallel grid steps
        tr = min(tr, (R // 2) // 8 * 8)
    tr = max(8, (tr // 8) * 8)            # sublane-aligned tile
    return R if tr >= R else tr


def mlp_kernel(w1h_ref, b1h_ref, w2h_ref, b2h_ref, x_ref, o_ref):
    # x_ref: (5, tr, 128) f32 VMEM tile, batch on (sublane, lane).
    # o_ref: (tr, 128)    f32 VMEM tile.
    # SMEM params (sigmoid folded into tanh on the host):
    #   w1h_ref: (15,) = 0.5 * W1^T, row-major (in=5, out=3)
    #   b1h_ref: (3,)  = 0.5 * b1
    #   w2h_ref: (3,)  = 0.5 * W2^T
    #   b2h_ref: (1,)  = b2 + 0.5 * sum(W2)
    # so  out = sum_j w2h[j] * tanh(x @ w1h[:, j] + b1h[j]) + b2h.
    xk = [x_ref[k] for k in range(5)]             # five (tr, 128) tiles

    out = None
    for j in range(3):                            # hidden units (unrolled)
        h = xk[0] * w1h_ref[0 * 3 + j]
        for k in range(1, 5):                     # input features (unrolled)
            h = h + xk[k] * w1h_ref[k * 3 + j]
        h = h + b1h_ref[j]
        t = jnp.tanh(h) * w2h_ref[j]              # tanh runs on the EUP slot
        out = t if out is None else out + t
    o_ref[...] = (out + b2h_ref[0]).astype(o_ref.dtype)


def multi_linear_regression(x, w1, b1, w2, b2, *, block_rows=2048):
    """x: (B, 5); w1: (5, 3) (= PyTorch linear1.weight.T); b1: (3,);
    w2: (3, 1) (= PyTorch linear2.weight.T); b2: (1,).  Returns (B, 1) f32."""
    B, feat = x.shape
    assert feat == 5, "MultiLinearRegression expects 5 input features"
    x = x.astype(jnp.float32)

    # ---- fold sigmoid(h) = 0.5*(tanh(h/2) + 1) into the 22 parameters ----
    w1h = (0.5 * w1).reshape(-1).astype(jnp.float32)                  # (15,)
    b1h = (0.5 * b1).reshape(-1).astype(jnp.float32)                  # (3,)
    w2f = w2.reshape(-1).astype(jnp.float32)                          # (3,)
    w2h = (0.5 * w2f).astype(jnp.float32)                             # (3,)
    b2h = (b2.reshape(-1) + 0.5 * jnp.sum(w2f)).astype(jnp.float32)   # (1,)

    # ---- lane/sublane-dense layout: batch -> (sublane, lane) -------------
    # Pad only to a multiple of 128 (not of the tile); the ragged tile tail is
    # masked by Pallas via pl.cdiv.
    B128 = _round_up(B, 128)
    R = B128 // 128
    # NOTE: the transpose (and the pad when B % 128 != 0) is one extra HBM
    # pass over x; storing activations feature-major upstream removes it.
    xT = jnp.transpose(x)                                   # (5, B)
    if B128 != B:
        xT = jnp.pad(xT, ((0, 0), (0, B128 - B)))
    x3 = xT.reshape(5, R, 128)                              # metadata-only

    tr = _pick_tile_rows(R, min(int(block_rows), 4096))     # cap for v7x VMEM
    grid = (pl.cdiv(R, tr),)

    # VMEM budget: double-buffered in+out tiles plus room for intermediates.
    tile_bytes = (5 + 1) * tr * 128 * 4
    vmem_limit = int(min(max(3 * tile_bytes + (8 << 20), 32 << 20), 56 << 20))

    smem = pl.BlockSpec(memory_space=pltpu.MemorySpace.SMEM)
    out = pl.pallas_call(
        mlp_kernel,
        out_shape=jax.ShapeDtypeStruct((R, 128), jnp.float32),
        grid_spec=pl.GridSpec(
            grid=grid,
            in_specs=[
                smem,                                            # w1h (15,)
                smem,                                            # b1h (3,)
                smem,                                            # w2h (3,)
                smem,                                            # b2h (1,)
                pl.BlockSpec((5, tr, 128), lambda i: (0, i, 0)),  # x tile
            ],
            out_specs=pl.BlockSpec((tr, 128), lambda i: (i, 0)),
        ),
        compiler_params=pltpu.CompilerParams(
            dimension_semantics=("parallel",),   # shard batch tiles across TCs
            vmem_limit_bytes=vmem_limit,
        ),
    )(w1h, b1h, w2h, b2h, x3)

    return out.reshape(B128)[:B].reshape(B, 1)


if __name__ == "__main__":
    key = jax.random.PRNGKey(0)
    k_x, k_w1, k_b1, k_w2, k_b2 = jax.random.split(key, 5)

    # Deterministic "PyTorch-like" init: U(-1/sqrt(fan_in), 1/sqrt(fan_in)).
    bound1 = 1.0 / jnp.sqrt(5.0)
    bound2 = 1.0 / jnp.sqrt(3.0)
    # Stored pre-transposed as (in, out) = PyTorch weight.T.
    w1 = jax.random.uniform(k_w1, (5, 3), jnp.float32, -bound1, bound1)
    b1 = jax.random.uniform(k_b1, (3,), jnp.float32, -bound1, bound1)
    w2 = jax.random.uniform(k_w2, (3, 1), jnp.float32, -bound2, bound2)
    b2 = jax.random.uniform(k_b2, (1,), jnp.float32, -bound2, bound2)

    def ref_fn(xv):
        h = jnp.einsum("bi,ij->bj", xv, w1,
                       precision=jax.lax.Precision.HIGHEST) + b1
        s = jax.nn.sigmoid(h)
        return jnp.einsum("bj,jo->bo", s, w2,
                          precision=jax.lax.Precision.HIGHEST) + b2

    # (batch, block_rows) cases:
    #   B=8    : single partial-sublane tile (R=1)
    #   B=300  : ragged batch, single tile (R=3)
    #   B=1200 : multi-step grid with a masked ragged tail (R=10, tr=8)
    for B, rows in ((8, 2048), (300, 2048), (1200, 8)):
        x = jax.random.normal(jax.random.fold_in(k_x, B), (B, 5), jnp.float32)
        out = jax.block_until_ready(
            multi_linear_regression(x, w1, b1, w2, b2, block_rows=rows))
        ref = ref_fn(x)
        assert out.shape == (B, 1)
        assert jnp.allclose(out, ref, atol=1e-5, rtol=1e-5), (
            B, float(jnp.max(jnp.abs(out - ref))))

    print("KERNEL_OK")
</pallas_src>

<mosaic_0001>
module attributes {stable_mosaic.version = 11 : i64} {
  func.func @mlp_kernel(%arg0: i32, %arg1: memref<15xf32, #tpu.memory_space<smem>>, %arg2: memref<3xf32, #tpu.memory_space<smem>>, %arg3: memref<3xf32, #tpu.memory_space<smem>>, %arg4: memref<1xf32, #tpu.memory_space<smem>>, %arg5: memref<5x1x128xf32, #tpu.memory_space<vmem>>, %arg6: memref<1x128xf32, #tpu.memory_space<vmem>>) attributes {dimension_semantics = [#tpu.dimension_semantics<parallel>], iteration_bounds = array<i64: 1>, scalar_prefetch = 0 : i64, scratch_operands = 0 : i64, tpu.core_type = #tpu.core_type<tc>, window_params = [{transform_indices = @transform_0, window_bounds = array<i64: 15>}, {transform_indices = @transform_1, window_bounds = array<i64: 3>}, {transform_indices = @transform_2, window_bounds = array<i64: 3>}, {transform_indices = @transform_3, window_bounds = array<i64: 1>}, {transform_indices = @transform_4, window_bounds = array<i64: 5, 1, 128>}, {transform_indices = @transform_5, window_bounds = array<i64: 1, 128>}]} {
    %c0 = arith.constant 0 : index
    %c0_0 = arith.constant 0 : index
    %c0_1 = arith.constant 0 : index
    %0 = vector.load %arg5[%c0, %c0_0, %c0_1] : memref<5x1x128xf32, #tpu.memory_space<vmem>>, vector<1x1x128xf32>
    %1 = vector.shape_cast %0 : vector<1x1x128xf32> to vector<1x128xf32>
    %c1 = arith.constant 1 : index
    %c0_2 = arith.constant 0 : index
    %c0_3 = arith.constant 0 : index
    %2 = vector.load %arg5[%c1, %c0_2, %c0_3] : memref<5x1x128xf32, #tpu.memory_space<vmem>>, vector<1x1x128xf32>
    %3 = vector.shape_cast %2 : vector<1x1x128xf32> to vector<1x128xf32>
    %c2 = arith.constant 2 : index
    %c0_4 = arith.constant 0 : index
    %c0_5 = arith.constant 0 : index
    %4 = vector.load %arg5[%c2, %c0_4, %c0_5] : memref<5x1x128xf32, #tpu.memory_space<vmem>>, vector<1x1x128xf32>
    %5 = vector.shape_cast %4 : vector<1x1x128xf32> to vector<1x128xf32>
    %c3 = arith.constant 3 : index
    %c0_6 = arith.constant 0 : index
    %c0_7 = arith.constant 0 : index
    %6 = vector.load %arg5[%c3, %c0_6, %c0_7] : memref<5x1x128xf32, #tpu.memory_space<vmem>>, vector<1x1x128xf32>
    %7 = vector.shape_cast %6 : vector<1x1x128xf32> to vector<1x128xf32>
    %c4 = arith.constant 4 : index
    %c0_8 = arith.constant 0 : index
    %c0_9 = arith.constant 0 : index
    %8 = vector.load %arg5[%c4, %c0_8, %c0_9] : memref<5x1x128xf32, #tpu.memory_space<vmem>>, vector<1x1x128xf32>
    %9 = vector.shape_cast %8 : vector<1x1x128xf32> to vector<1x128xf32>
    %c0_10 = arith.constant 0 : index
    %10 = memref.load %arg1[%c0_10] : memref<15xf32, #tpu.memory_space<smem>>
    %11 = vector.broadcast %10 : f32 to vector<1x128xf32>
    %12 = arith.mulf %1, %11 : vector<1x128xf32>
    %c3_11 = arith.constant 3 : index
    %13 = memref.load %arg1[%c3_11] : memref<15xf32, #tpu.memory_space<smem>>
    %14 = vector.broadcast %13 : f32 to vector<1x128xf32>
    %15 = arith.mulf %3, %14 : vector<1x128xf32>
    %16 = arith.addf %12, %15 : vector<1x128xf32>
    %c6 = arith.constant 6 : index
    %17 = memref.load %arg1[%c6] : memref<15xf32, #tpu.memory_space<smem>>
    %18 = vector.broadcast %17 : f32 to vector<1x128xf32>
    %19 = arith.mulf %5, %18 : vector<1x128xf32>
    %20 = arith.addf %16, %19 : vector<1x128xf32>
    %c9 = arith.constant 9 : index
    %21 = memref.load %arg1[%c9] : memref<15xf32, #tpu.memory_space<smem>>
    %22 = vector.broadcast %21 : f32 to vector<1x128xf32>
    %23 = arith.mulf %7, %22 : vector<1x128xf32>
    %24 = arith.addf %20, %23 : vector<1x128xf32>
    %c12 = arith.constant 12 : index
    %25 = memref.load %arg1[%c12] : memref<15xf32, #tpu.memory_space<smem>>
    %26 = vector.broadcast %25 : f32 to vector<1x128xf32>
    %27 = arith.mulf %9, %26 : vector<1x128xf32>
    %28 = arith.addf %24, %27 : vector<1x128xf32>
    %c0_12 = arith.constant 0 : index
    %29 = memref.load %arg2[%c0_12] : memref<3xf32, #tpu.memory_space<smem>>
    %30 = vector.broadcast %29 : f32 to vector<1x128xf32>
    %31 = arith.addf %28, %30 : vector<1x128xf32>
    %32 = math.tanh %31 : vector<1x128xf32>
    %c0_13 = arith.constant 0 : index
    %33 = memref.load %arg3[%c0_13] : memref<3xf32, #tpu.memory_space<smem>>
    %34 = vector.broadcast %33 : f32 to vector<1x128xf32>
    %35 = arith.mulf %32, %34 : vector<1x128xf32>
    %c1_14 = arith.constant 1 : index
    %36 = memref.load %arg1[%c1_14] : memref<15xf32, #tpu.memory_space<smem>>
    %37 = vector.broadcast %36 : f32 to vector<1x128xf32>
    %38 = arith.mulf %1, %37 : vector<1x128xf32>
    %c4_15 = arith.constant 4 : index
    %39 = memref.load %arg1[%c4_15] : memref<15xf32, #tpu.memory_space<smem>>
    %40 = vector.broadcast %39 : f32 to vector<1x128xf32>
    %41 = arith.mulf %3, %40 : vector<1x128xf32>
    %42 = arith.addf %38, %41 : vector<1x128xf32>
    %c7 = arith.constant 7 : index
    %43 = memref.load %arg1[%c7] : memref<15xf32, #tpu.memory_space<smem>>
    %44 = vector.broadcast %43 : f32 to vector<1x128xf32>
    %45 = arith.mulf %5, %44 : vector<1x128xf32>
    %46 = arith.addf %42, %45 : vector<1x128xf32>
    %c10 = arith.constant 10 : index
    %47 = memref.load %arg1[%c10] : memref<15xf32, #tpu.memory_space<smem>>
    %48 = vector.broadcast %47 : f32 to vector<1x128xf32>
    %49 = arith.mulf %7, %48 : vector<1x128xf32>
    %50 = arith.addf %46, %49 : vector<1x128xf32>
    %c13 = arith.constant 13 : index
    %51 = memref.load %arg1[%c13] : memref<15xf32, #tpu.memory_space<smem>>
    %52 = vector.broadcast %51 : f32 to vector<1x128xf32>
    %53 = arith.mulf %9, %52 : vector<1x128xf32>
    %54 = arith.addf %50, %53 : vector<1x128xf32>
    %c1_16 = arith.constant 1 : index
    %55 = memref.load %arg2[%c1_16] : memref<3xf32, #tpu.memory_space<smem>>
    %56 = vector.broadcast %55 : f32 to vector<1x128xf32>
    %57 = arith.addf %54, %56 : vector<1x128xf32>
    %58 = math.tanh %57 : vector<1x128xf32>
    %c1_17 = arith.constant 1 : index
    %59 = memref.load %arg3[%c1_17] : memref<3xf32, #tpu.memory_space<smem>>
    %60 = vector.broadcast %59 : f32 to vector<1x128xf32>
    %61 = arith.mulf %58, %60 : vector<1x128xf32>
    %62 = arith.addf %35, %61 : vector<1x128xf32>
    %c2_18 = arith.constant 2 : index
    %63 = memref.load %arg1[%c2_18] : memref<15xf32, #tpu.memory_space<smem>>
    %64 = vector.broadcast %63 : f32 to vector<1x128xf32>
    %65 = arith.mulf %1, %64 : vector<1x128xf32>
    %c5 = arith.constant 5 : index
    %66 = memref.load %arg1[%c5] : memref<15xf32, #tpu.memory_space<smem>>
    %67 = vector.broadcast %66 : f32 to vector<1x128xf32>
    %68 = arith.mulf %3, %67 : vector<1x128xf32>
    %69 = arith.addf %65, %68 : vector<1x128xf32>
    %c8 = arith.constant 8 : index
    %70 = memref.load %arg1[%c8] : memref<15xf32, #tpu.memory_space<smem>>
    %71 = vector.broadcast %70 : f32 to vector<1x128xf32>
    %72 = arith.mulf %5, %71 : vector<1x128xf32>
    %73 = arith.addf %69, %72 : vector<1x128xf32>
    %c11 = arith.constant 11 : index
    %74 = memref.load %arg1[%c11] : memref<15xf32, #tpu.memory_space<smem>>
    %75 = vector.broadcast %74 : f32 to vector<1x128xf32>
    %76 = arith.mulf %7, %75 : vector<1x128xf32>
    %77 = arith.addf %73, %76 : vector<1x128xf32>
    %c14 = arith.constant 14 : index
    %78 = memref.load %arg1[%c14] : memref<15xf32, #tpu.memory_space<smem>>
    %79 = vector.broadcast %78 : f32 to vector<1x128xf32>
    %80 = arith.mulf %9, %79 : vector<1x128xf32>
    %81 = arith.addf %77, %80 : vector<1x128xf32>
    %c2_19 = arith.constant 2 : index
    %82 = memref.load %arg2[%c2_19] : memref<3xf32, #tpu.memory_space<smem>>
    %83 = vector.broadcast %82 : f32 to vector<1x128xf32>
    %84 = arith.addf %81, %83 : vector<1x128xf32>
    %85 = math.tanh %84 : vector<1x128xf32>
    %c2_20 = arith.constant 2 : index
    %86 = memref.load %arg3[%c2_20] : memref<3xf32, #tpu.memory_space<smem>>
    %87 = vector.broadcast %86 : f32 to vector<1x128xf32>
    %88 = arith.mulf %85, %87 : vector<1x128xf32>
    %89 = arith.addf %62, %88 : vector<1x128xf32>
    %c0_21 = arith.constant 0 : index
    %90 = memref.load %arg4[%c0_21] : memref<1xf32, #tpu.memory_space<smem>>
    %91 = vector.broadcast %90 : f32 to vector<1x128xf32>
    %92 = arith.addf %89, %91 : vector<1x128xf32>
    %c0_22 = arith.constant 0 : index
    %c0_23 = arith.constant 0 : index
    %93 = vector.load %arg6[%c0_22, %c0_23] : memref<1x128xf32, #tpu.memory_space<vmem>>, vector<1x128xf32>
    tpu.vector_store %arg6[%c0_22, %c0_23], %92 {strides = array<i32>} : memref<1x128xf32, #tpu.memory_space<vmem>>, vector<1x128xf32>,
    return
  }
  func.func @transform_0(%arg0: i32) -> i32 {
    %c0_i32 = arith.constant 0 : i32
    %c0_i32_0 = arith.constant 0 : i32
    return %c0_i32 : i32
  }
  func.func @transform_1(%arg0: i32) -> i32 {
    %c0_i32 = arith.constant 0 : i32
    %c0_i32_0 = arith.constant 0 : i32
    return %c0_i32 : i32
  }
  func.func @transform_2(%arg0: i32) -> i32 {
    %c0_i32 = arith.constant 0 : i32
    %c0_i32_0 = arith.constant 0 : i32
    return %c0_i32 : i32
  }
  func.func @transform_3(%arg0: i32) -> i32 {
    %c0_i32 = arith.constant 0 : i32
    %c0_i32_0 = arith.constant 0 : i32
    return %c0_i32 : i32
  }
  func.func @transform_4(%arg0: i32) -> (i32, i32, i32) {
    %c0_i32 = arith.constant 0 : i32
    %c0_i32_0 = arith.constant 0 : i32
    %c0_i32_1 = arith.constant 0 : i32
    return %c0_i32, %arg0, %c0_i32_0 : i32, i32, i32
  }
  func.func @transform_5(%arg0: i32) -> (i32, i32) {
    %c0_i32 = arith.constant 0 : i32
    %c0_i32_0 = arith.constant 0 : i32
    return %arg0, %c0_i32 : i32, i32
  }
}

</mosaic_0001>

<llo_original>
// kernel: tpu_custom_call.1
$region0: #{tpu_custom_call.1}
  #allocation0 [shape = 'u32[]', space=smem, size = 0x4, offset = 0x4, fixed_abs, tag = 'smem constant byte address 0x4 - core index']
  #allocation1 [shape = 'u32[72,128]{1,0:T(1,128)}', space=vmem, size = 0x9000, scoped, tag = 'internal scratch']
  #allocation2 [shape = 'f32[1]{0:T(128)S(6)}', space=smem, size = 0x200, scoped, tag = 'scoped memory for tpu_custom_call.1']
  %s0 = inlined_call_operand.vmem [shape: f32[15], index: 0, kind: input, shape index: {}]
  %s1 = inlined_call_operand.vmem [shape: f32[3], index: 1, kind: input, shape index: {}]
  %s2 = inlined_call_operand.vmem [shape: f32[3], index: 2, kind: input, shape index: {}]
  %s3 = inlined_call_operand.<no memory space> [shape: f32[1], index: 3, kind: input, shape index: {}]
  %s4 = inlined_call_operand.hbm [shape: f32[5,1,128], index: 4, kind: input, shape index: {}]
  %s5 = inlined_call_operand.hbm [shape: f32[1,128], index: 5, kind: output, shape index: {}]
  %s6 = sld [smem:[#allocation0]]
  $region46: #{tpu_custom_call.1} parent=0
    _
  %s8 = ssub.s32 1, %s6
  %s9 = scalar_select 0, %s8, %s6
  %10 = sst [smem:[#allocation2]] %s3
  $region1: #{tpu_custom_call.1} parent=0
    #allocation3 [shape = 'u8[512]{0}', space=smem, size = 0x200, scoped, tag = 'input window, operand 0, single buffered']
    #allocation4 [shape = 's32[1]{0}', space=sflag, size = 0x4, scoped, tag = 'scoped memory for tpu_custom_call.1']
    #allocation5 [shape = 's32[1]{0}', space=sflag, size = 0x4, scoped, tag = 'scoped memory for tpu_custom_call.1']
    #allocation6 [shape = 's32[1]{0}', space=sflag, size = 0x4, scoped, tag = 'scoped memory for tpu_custom_call.1']
    #allocation7 [shape = 'u8[512]{0}', space=smem, size = 0x200, scoped, tag = 'input window, operand 1, single buffered']
    #allocation8 [shape = 's32[1]{0}', space=sflag, size = 0x4, scoped, tag = 'scoped memory for tpu_custom_call.1']
    #allocation9 [shape = 'u8[512]{0}', space=smem, size = 0x200, scoped, tag = 'input window, operand 2, single buffered']
    #allocation10 [shape = 'u8[2560]{0}', space=vmem, size = 0xc00, scoped, tag = 'input window, operand 4, single buffered']
    #allocation11 [shape = 'u8[512]{0}', space=vmem, size = 0x400, scoped, tag = 'output window, operand 0, single buffered']
    %11 = vsyncpa [#allocation6], 0
    %12 = vsyncpa [#allocation8], 0
    %13 = vsyncpa [#allocation4], 0
    %14 = vsyncpa [#allocation5], 0
    // Predicated region
    $region2: #{tpu_custom_call.1} parent=1 // pred_check
      _
    $region3: #{tpu_custom_call.1} parent=1 // pred_check_branch
      %16 = sbr.rel (0) target = $region5
    $region4: #{tpu_custom_call.1} parent=1 // pred_region
      %18 = vsyncadd [#allocation6], 0
      %s20 = sshll.u32 %s0, 4
      %s21 = int_to_ptr.vmem [resolvable:$true] %s20
      %23 = dma.vmem_to_smem %s21, 16, [#allocation3], [#allocation6]
    $region5: #{tpu_custom_call.1} parent=1 // pred_fallthru
      _
    // Predicated region
    $region6: #{tpu_custom_call.1} parent=1 // pred_check
      _
    $region7: #{tpu_custom_call.1} parent=1 // pred_check_branch
      %25 = sbr.rel (0) target = $region9
    $region8: #{tpu_custom_call.1} parent=1 // pred_region
      %27 = vsyncadd [#allocation8], 0
      %s29 = sshll.u32 %s1, 4
      %s30 = int_to_ptr.vmem [resolvable:$true] %s29
      %32 = dma.vmem_to_smem %s30, 16, [#allocation7], [#allocation8]
    $region9: #{tpu_custom_call.1} parent=1 // pred_fallthru
      _
    // Predicated region
    $region10: #{tpu_custom_call.1} parent=1 // pred_check
      _
    $region11: #{tpu_custom_call.1} parent=1 // pred_check_branch
      %34 = sbr.rel (0) target = $region13
    $region12: #{tpu_custom_call.1} parent=1 // pred_region
      %36 = vsyncadd [#allocation8], 0
      %s38 = sshll.u32 %s2, 4
      %s39 = int_to_ptr.vmem [resolvable:$true] %s38
      %41 = dma.vmem_to_smem %s39, 16, [#allocation9], [#allocation8]
    $region13: #{tpu_custom_call.1} parent=1 // pred_fallthru
      _
    // Predicated region
    $region14: #{tpu_custom_call.1} parent=1 // pred_check
      _
    $region15: #{tpu_custom_call.1} parent=1 // pred_check_branch
      %43 = sbr.rel (0) target = $region17
    $region16: #{tpu_custom_call.1} parent=1 // pred_region
      _
    $region17: #{tpu_custom_call.1} parent=1 // pred_fallthru
      _
    // Predicated region
    $region18: #{tpu_custom_call.1} parent=1 // pred_check
      _
    $region19: #{tpu_custom_call.1} parent=1 // pred_check_branch
      %45 = sbr.rel (0) target = $region21
    $region20: #{tpu_custom_call.1} parent=1 // pred_region
      %47 = vsyncadd [#allocation4], 0
      %s48 = sshll.u32 %s4, 4
      %s49 = int_to_ptr.hbm [resolvable:$true] %s48
      %s50 = sshll.u32 [#allocation10], 4
      %s51 = int_to_ptr.vmem [resolvable:$true] %s50
      %56 = dma.hbm_to_vmem [thread:$0]  %s49, 80, %s51, [#allocation4], 16, 16, 1
    $region21: #{tpu_custom_call.1} parent=1 // pred_fallthru
      _
    // Predicated region
    $region22: #{tpu_custom_call.1} parent=1 // pred_check
      _
    $region23: #{tpu_custom_call.1} parent=1 // pred_check_branch
      %58 = sbr.rel (0) target = $region25
    $region24: #{tpu_custom_call.1} parent=1 // pred_region
      %60 = dma.done [#allocation6], 16
    $region25: #{tpu_custom_call.1} parent=1 // pred_fallthru
      _
    // Predicated region
    $region26: #{tpu_custom_call.1} parent=1 // pred_check
      _
    $region27: #{tpu_custom_call.1} parent=1 // pred_check_branch
      %62 = sbr.rel (0) target = $region29
    $region28: #{tpu_custom_call.1} parent=1 // pred_region
      %64 = dma.done [#allocation8], 16
    $region29: #{tpu_custom_call.1} parent=1 // pred_fallthru
      _
    // Predicated region
    $region30: #{tpu_custom_call.1} parent=1 // pred_check
      _
    $region31: #{tpu_custom_call.1} parent=1 // pred_check_branch
      %66 = sbr.rel (0) target = $region33
    $region32: #{tpu_custom_call.1} parent=1 // pred_region
      %68 = dma.done [#allocation8], 16
    $region33: #{tpu_custom_call.1} parent=1 // pred_fallthru
      _
    // Predicated region
    $region34: #{tpu_custom_call.1} parent=1 // pred_check
      _
    $region35: #{tpu_custom_call.1} parent=1 // pred_check_branch
      %70 = sbr.rel (0) target = $region37
    $region36: #{tpu_custom_call.1} parent=1 // pred_region
      %72 = dma.done [#allocation4], 80
    $region37: #{tpu_custom_call.1} parent=1 // pred_fallthru
      _
    %73 = sfence
    %v74 = vld [vmem:[#allocation10] sm:$0x1]
    %s75 = scalar_lea.vmem [#allocation10], 1
    %v76 = vld [vmem:[%s75] sm:$0x1]
    %s77 = scalar_lea.vmem [#allocation10], 2
    %v78 = vld [vmem:[%s77] sm:$0x1]
    %s79 = scalar_lea.vmem [#allocation10], 3
    %v80 = vld [vmem:[%s79] sm:$0x1]
    %s81 = scalar_lea.vmem [#allocation10], 4
    %v82 = vld [vmem:[%s81] sm:$0x1]
    %s83 = sld [smem:[#allocation3]]
    %v84 = vstv %s83
    %v85 = vmul.f32 %v74, %v84
    %s86 = sld [smem:[#allocation3 + $0x3]]
    %v87 = vstv %s86
    %v88 = vmul.f32 %v76, %v87
    %v89 = vadd.f32 %v85, %v88
    %s90 = sld [smem:[#allocation3 + $0x6]]
    %v91 = vstv %s90
    %v92 = vmul.f32 %v78, %v91
    %v93 = vadd.f32 %v89, %v92
    %s94 = sld [smem:[#allocation3 + $0x9]]
    %v95 = vstv %s94
    %v96 = vmul.f32 %v80, %v95
    %v97 = vadd.f32 %v93, %v96
    %s98 = sld [smem:[#allocation3 + $0xc]]
    %v99 = vstv %s98
    %v100 = vmul.f32 %v82, %v99
    %v101 = vadd.f32 %v97, %v100
    %s102 = sld [smem:[#allocation7]]
    %v103 = vstv %s102
    %v104 = vadd.f32 %v101, %v103
    %v105 = vtanh.pop %v104
    %s106 = sld [smem:[#allocation9]]
    %v107 = vstv %s106
    %v108 = vmul.f32 %v105, %v107
    %s109 = sld [smem:[#allocation3 + $0x1]]
    %v110 = vstv %s109
    %v111 = vmul.f32 %v74, %v110
    %s112 = sld [smem:[#allocation3 + $0x4]]
    %v113 = vstv %s112
    %v114 = vmul.f32 %v76, %v113
    %v115 = vadd.f32 %v111, %v114
    %s116 = sld [smem:[#allocation3 + $0x7]]
    %v117 = vstv %s116
    %v118 = vmul.f32 %v78, %v117
    %v119 = vadd.f32 %v115, %v118
    %s120 = sld [smem:[#allocation3 + $0xa]]
    %v121 = vstv %s120
    %v122 = vmul.f32 %v80, %v121
    %v123 = vadd.f32 %v119, %v122
    %s124 = sld [smem:[#allocation3 + $0xd]]
    %v125 = vstv %s124
    %v126 = vmul.f32 %v82, %v125
    %v127 = vadd.f32 %v123, %v126
    %s128 = sld [smem:[#allocation7 + $0x1]]
    %v129 = vstv %s128
    %v130 = vadd.f32 %v127, %v129
    %v131 = vtanh.pop %v130
    %s132 = sld [smem:[#allocation9 + $0x1]]
    %v133 = vstv %s132
    %v134 = vmul.f32 %v131, %v133
    %v135 = vadd.f32 %v108, %v134
    %s136 = sld [smem:[#allocation3 + $0x2]]
    %v137 = vstv %s136
    %v138 = vmul.f32 %v74, %v137
    %s139 = sld [smem:[#allocation3 + $0x5]]
    %v140 = vstv %s139
    %v141 = vmul.f32 %v76, %v140
    %v142 = vadd.f32 %v138, %v141
    %s143 = sld [smem:[#allocation3 + $0x8]]
    %v144 = vstv %s143
    %v145 = vmul.f32 %v78, %v144
    %v146 = vadd.f32 %v142, %v145
    %s147 = sld [smem:[#allocation3 + $0xb]]
    %v148 = vstv %s147
    %v149 = vmul.f32 %v80, %v148
    %v150 = vadd.f32 %v146, %v149
    %s151 = sld [smem:[#allocation3 + $0xe]]
    %v152 = vstv %s151
    %v153 = vmul.f32 %v82, %v152
    %v154 = vadd.f32 %v150, %v153
    %s155 = sld [smem:[#allocation7 + $0x2]]
    %v156 = vstv %s155
    %v157 = vadd.f32 %v154, %v156
    %v158 = vtanh.pop %v157
    %s159 = sld [smem:[#allocation9 + $0x2]]
    %v160 = vstv %s159
    %v161 = vmul.f32 %v158, %v160
    %v162 = vadd.f32 %v135, %v161
    %s163 = sld [smem:[#allocation2]]
    %v164 = vstv %s163
    %v165 = vadd.f32 %v162, %v164
    %166 = vst [vmem:[#allocation11] sm:$0x1] %v165
    // Predicated region
    $region38: #{tpu_custom_call.1} parent=1 // pred_check
      _
    $region39: #{tpu_custom_call.1} parent=1 // pred_check_branch
      %168 = sbr.rel (0) target = $region41
    $region40: #{tpu_custom_call.1} parent=1 // pred_region
      %170 = vsyncadd [#allocation5], 0
      %s172 = sshll.u32 [#allocation11], 4
      %s173 = int_to_ptr.vmem [resolvable:$true] %s172
      %s174 = sshll.u32 %s5, 4
      %s175 = int_to_ptr.hbm [resolvable:$true] %s174
      %177 = dma.vmem_to_hbm [thread:$0]  %s173, 16, %s175, [#allocation5]
    $region41: #{tpu_custom_call.1} parent=1 // pred_fallthru
      _
    // Predicated region
    $region42: #{tpu_custom_call.1} parent=1 // pred_check
      _
    $region43: #{tpu_custom_call.1} parent=1 // pred_check_branch
      %179 = sbr.rel (0) target = $region45
    $region44: #{tpu_custom_call.1} parent=1 // pred_region
      %181 = dma.done [#allocation5], 16
    $region45: #{tpu_custom_call.1} parent=1 // pred_fallthru
      _
    %182 = vsyncpa [#allocation4], 1
    %183 = vsyncpa [#allocation5], 1
    %184 = vsyncpa [#allocation6], 1
    %185 = vsyncpa [#allocation8], 1

</llo_original>
